<compile_context>
chip_gen: v5e
topology: v5e:2x2
jax: 0.10.0
libtpu: 0.0.40
codegen_flags: <defaults>
</compile_context>

<pallas_src>
import jax
import jax.numpy as jnp
from jax.experimental import pallas as pl
from jax.experimental.pallas import tpu as pltpu


def _patch_embed_kernel(x_ref, w1_ref, b1_ref, w2_ref, b2_ref, o_ref):
    # x_ref:  (1, C_in, TP)    NCHW pixels, spatial on the lane axis
    # w1_ref: (hidden, C_in)   fused conv1+bn1 weight
    # b1_ref: (hidden, 1)      fused conv1+bn1 bias (f32)
    # w2_ref: (embed, hidden)  fused conv2+bn2 weight
    # b2_ref: (embed, 1)       fused conv2+bn2 bias (f32)
    # o_ref:  (1, embed, TP)
    x = x_ref[0]
    h = jnp.dot(w1_ref[...], x, preferred_element_type=jnp.float32) + b1_ref[...]
    h = jax.nn.gelu(h, approximate=True)            # f32 tanh-GELU -> EUP
    out = jnp.dot(w2_ref[...], h.astype(w2_ref.dtype),
                  preferred_element_type=jnp.float32) + b2_ref[...]
    o_ref[0] = out.astype(o_ref.dtype)


def _pick_spatial_tile(hw, batch, c_in, hidden, embed, itemsize):
    """Lane-axis (spatial) tile: multiple of 128, big, VMEM-safe, >= ~8 grid steps."""
    if hw % 128 != 0:
        # Not lane-aligned: take the full extent (block == full dim is always legal).
        return hw
    # VMEM budget sized for v7x's smaller scoped VMEM: double-buffered in/out
    # tiles + f32 intermediates, counted per spatial element.
    bytes_per_p = 2 * (c_in + embed) * itemsize + 4 * (hidden + 2 * embed)
    vmem_cap = (24 * 1024 * 1024) // bytes_per_p
    tile = min(hw, 8192, max(128, vmem_cap))
    tile = max(128, (tile // 128) * 128)
    # Keep >= 8 total grid steps (>= 4 per TensorCore on v7x) when hw allows.
    while tile > 128 and batch * pl.cdiv(hw, tile) < 8:
        tile = max(128, ((tile // 2) // 128) * 128)
    return tile


def patch_embed_forward(x_nchw, w1, b1, w2, b2, compute_dtype=None):
    """Pallas TPU PatchEmbed forward.

    Args:
      x_nchw: (B, C_in, H, W) input (PyTorch NCHW layout).
      w1, b1: fused Conv2d_BN #1 -> (hidden, C_in), (hidden,)
      w2, b2: fused Conv2d_BN #2 -> (embed, hidden), (embed,)
      compute_dtype: optional I/O dtype (e.g. jnp.bfloat16) for x / w1 / w2 and
        the output.  MXU accumulation and GELU math stay in f32.
    Returns:
      (B, embed, H, W) output (PyTorch NCHW layout).
    """
    B, C_in, H, W = x_nchw.shape
    hidden = w1.shape[0]
    embed = w2.shape[0]
    hw = H * W

    if compute_dtype is not None:
        x_nchw = x_nchw.astype(compute_dtype)
        w1 = w1.astype(compute_dtype)
        w2 = w2.astype(compute_dtype)
    out_dtype = x_nchw.dtype
    itemsize = jnp.dtype(out_dtype).itemsize

    # 1x1 conv == per-pixel matmul.  Keep NCHW: (B,C,H,W) -> (B,C,H*W) is a
    # free contiguous reshape — no transpose pass, no pad pass.
    x_flat = x_nchw.reshape(B, C_in, hw)
    b1_2d = b1.astype(jnp.float32).reshape(hidden, 1)
    b2_2d = b2.astype(jnp.float32).reshape(embed, 1)

    tile_p = _pick_spatial_tile(hw, B, C_in, hidden, embed, itemsize)
    grid = (B, pl.cdiv(hw, tile_p))

    cost = pl.CostEstimate(
        flops=2 * B * hw * (C_in * hidden + hidden * embed),
        transcendentals=B * hw * hidden,
        bytes_accessed=B * hw * (C_in + embed) * itemsize,
    )

    out_flat = pl.pallas_call(
        _patch_embed_kernel,
        out_shape=jax.ShapeDtypeStruct((B, embed, hw), out_dtype),
        grid=grid,
        in_specs=[
            pl.BlockSpec((1, C_in, tile_p), lambda b, p: (b, 0, p)),
            pl.BlockSpec((hidden, C_in), lambda b, p: (0, 0)),   # resident weights
            pl.BlockSpec((hidden, 1), lambda b, p: (0, 0)),
            pl.BlockSpec((embed, hidden), lambda b, p: (0, 0)),
            pl.BlockSpec((embed, 1), lambda b, p: (0, 0)),
        ],
        out_specs=pl.BlockSpec((1, embed, tile_p), lambda b, p: (b, 0, p)),
        compiler_params=pltpu.CompilerParams(
            dimension_semantics=("parallel", "parallel"),
        ),
        cost_estimate=cost,
    )(x_flat, w1, b1_2d, w2, b2_2d)

    return out_flat.reshape(B, embed, H, W)


def fuse_conv_bn(conv_w, gamma, beta, mean, var, eps=1e-5):
    """Fold a 1x1 Conv2d (no bias) + BatchNorm2d into (out,in) weight + (out,) bias."""
    scale = gamma / jnp.sqrt(var + eps)            # (out,)
    w = conv_w * scale[:, None]                    # (out, in)
    b = beta - mean * scale                        # (out,)
    return w, b


if __name__ == "__main__":
    key = jax.random.PRNGKey(0)
    B, C_in, H, W = 2, 4, 16, 16
    embed_dim = 32
    hidden = embed_dim // 2
    eps = 1e-5

    ks = jax.random.split(key, 11)
    x = jax.random.normal(ks[0], (B, C_in, H, W), dtype=jnp.float32)

    # Conv2d_BN #1 parameters (conv weight is (out, in) after squeezing 1x1 taps).
    conv1_w = 0.5 * jax.random.normal(ks[1], (hidden, C_in), dtype=jnp.float32)
    gamma1 = 1.0 + 0.1 * jax.random.normal(ks[2], (hidden,), dtype=jnp.float32)
    beta1 = 0.1 * jax.random.normal(ks[3], (hidden,), dtype=jnp.float32)
    mean1 = 0.1 * jax.random.normal(ks[4], (hidden,), dtype=jnp.float32)
    var1 = jnp.abs(jax.random.normal(ks[5], (hidden,), dtype=jnp.float32)) + 0.5

    # Conv2d_BN #2 parameters.
    conv2_w = 0.5 * jax.random.normal(ks[6], (embed_dim, hidden), dtype=jnp.float32)
    gamma2 = 1.0 + 0.1 * jax.random.normal(ks[7], (embed_dim,), dtype=jnp.float32)
    beta2 = 0.1 * jax.random.normal(ks[8], (embed_dim,), dtype=jnp.float32)
    mean2 = 0.1 * jax.random.normal(ks[9], (embed_dim,), dtype=jnp.float32)
    var2 = jnp.abs(jax.random.normal(ks[10], (embed_dim,), dtype=jnp.float32)) + 0.5

    w1, b1 = fuse_conv_bn(conv1_w, gamma1, beta1, mean1, var1, eps)
    w2, b2 = fuse_conv_bn(conv2_w, gamma2, beta2, mean2, var2, eps)

    # f32 run (matches the module's default precision).
    out = jax.block_until_ready(patch_embed_forward(x, w1, b1, w2, b2))

    # Pure-JAX reference: unfused Conv1x1 -> BN -> GELU -> Conv1x1 -> BN.
    def conv1x1(inp, w):  # inp (B,C,H,W), w (O,C)
        return jnp.einsum("bchw,oc->bohw", inp, w,
                          precision=jax.lax.Precision.HIGHEST)

    def bn(inp, gamma, beta, mean, var):
        inv = gamma / jnp.sqrt(var + eps)
        return inp * inv[None, :, None, None] + (beta - mean * inv)[None, :, None, None]

    ref = conv1x1(x, conv1_w)
    ref = bn(ref, gamma1, beta1, mean1, var1)
    ref = jax.nn.gelu(ref, approximate=True)
    ref = conv1x1(ref, conv2_w)
    ref = bn(ref, gamma2, beta2, mean2, var2)

    assert out.shape == (B, embed_dim, H, W), f"bad shape {out.shape}"
    assert out.dtype == x.dtype
    assert jnp.allclose(out, ref, rtol=1e-3, atol=1e-3), (
        f"PatchEmbed mismatch, max err = {jnp.max(jnp.abs(out - ref))}"
    )

    # bf16 I/O run (perf-recommended path); loose tolerance vs the f32 reference.
    out_bf16 = jax.block_until_ready(
        patch_embed_forward(x, w1, b1, w2, b2, compute_dtype=jnp.bfloat16)
    )
    assert out_bf16.shape == (B, embed_dim, H, W)
    assert out_bf16.dtype == jnp.bfloat16
    out_bf16_f32 = out_bf16.astype(jnp.float32)
    assert bool(jnp.all(jnp.isfinite(out_bf16_f32)))
    assert jnp.allclose(out_bf16_f32, ref, rtol=1e-1, atol=3e-1), (
        f"bf16 PatchEmbed mismatch, max err = {jnp.max(jnp.abs(out_bf16_f32 - ref))}"
    )

    print("KERNEL_OK")
</pallas_src>

<mosaic_0001>
module attributes {stable_mosaic.version = 11 : i64} {
  func.func @_patch_embed_kernel(%arg0: i32, %arg1: i32, %arg2: memref<1x4x128xf32, #tpu.memory_space<vmem>>, %arg3: memref<16x4xf32, #tpu.memory_space<vmem>>, %arg4: memref<16x1xf32, #tpu.memory_space<vmem>>, %arg5: memref<32x16xf32, #tpu.memory_space<vmem>>, %arg6: memref<32x1xf32, #tpu.memory_space<vmem>>, %arg7: memref<1x32x128xf32, #tpu.memory_space<vmem>>) attributes {dimension_semantics = [#tpu.dimension_semantics<parallel>, #tpu.dimension_semantics<parallel>], iteration_bounds = array<i64: 2, 2>, scalar_prefetch = 0 : i64, scratch_operands = 0 : i64, tpu.core_type = #tpu.core_type<tc>, window_params = [{transform_indices = @transform_0, window_bounds = array<i64: 1, 4, 128>}, {pipeline_mode = #tpu.pipeline_mode<synchronous>, transform_indices = @transform_1, window_bounds = array<i64: 16, 4>}, {pipeline_mode = #tpu.pipeline_mode<synchronous>, transform_indices = @transform_2, window_bounds = array<i64: 16, 1>}, {pipeline_mode = #tpu.pipeline_mode<synchronous>, transform_indices = @transform_3, window_bounds = array<i64: 32, 16>}, {pipeline_mode = #tpu.pipeline_mode<synchronous>, transform_indices = @transform_4, window_bounds = array<i64: 32, 1>}, {transform_indices = @transform_5, window_bounds = array<i64: 1, 32, 128>}]} {
    %c0 = arith.constant 0 : index
    %c0_0 = arith.constant 0 : index
    %c0_1 = arith.constant 0 : index
    %0 = vector.load %arg2[%c0, %c0_0, %c0_1] : memref<1x4x128xf32, #tpu.memory_space<vmem>>, vector<1x4x128xf32>
    %1 = vector.shape_cast %0 : vector<1x4x128xf32> to vector<4x128xf32>
    %c0_2 = arith.constant 0 : index
    %c0_3 = arith.constant 0 : index
    %2 = vector.load %arg3[%c0_2, %c0_3] : memref<16x4xf32, #tpu.memory_space<vmem>>, vector<16x4xf32>
    %cst = arith.constant dense<0.000000e+00> : vector<16x128xf32>
    %3 = tpu.matmul %2, %1, %cst {dimension_numbers = #tpu.dot_dimension_numbers<[1], [0], [0], [1], [0, 0, 1, 1], [], []>} : vector<16x4xf32>, vector<4x128xf32>, vector<16x128xf32> -> vector<16x128xf32>
    %c0_4 = arith.constant 0 : index
    %c0_5 = arith.constant 0 : index
    %4 = vector.load %arg4[%c0_4, %c0_5] : memref<16x1xf32, #tpu.memory_space<vmem>>, vector<16x1xf32>
    %5 = vector.broadcast %4 : vector<16x1xf32> to vector<16x128xf32>
    %6 = arith.addf %3, %5 : vector<16x128xf32>
    %7 = arith.mulf %6, %6 : vector<16x128xf32>
    %8 = arith.mulf %6, %7 : vector<16x128xf32>
    %cst_6 = arith.constant 4.471500e-02 : f32
    %9 = vector.broadcast %cst_6 : f32 to vector<16x128xf32>
    %10 = arith.mulf %9, %8 : vector<16x128xf32>
    %11 = arith.addf %6, %10 : vector<16x128xf32>
    %cst_7 = arith.constant 0.797884583 : f32
    %12 = vector.broadcast %cst_7 : f32 to vector<16x128xf32>
    %13 = arith.mulf %12, %11 : vector<16x128xf32>
    %14 = math.tanh %13 : vector<16x128xf32>
    %cst_8 = arith.constant 1.000000e+00 : f32
    %15 = vector.broadcast %cst_8 : f32 to vector<16x128xf32>
    %16 = arith.addf %15, %14 : vector<16x128xf32>
    %cst_9 = arith.constant 5.000000e-01 : f32
    %17 = vector.broadcast %cst_9 : f32 to vector<16x128xf32>
    %18 = arith.mulf %17, %16 : vector<16x128xf32>
    %19 = arith.mulf %6, %18 : vector<16x128xf32>
    %c0_10 = arith.constant 0 : index
    %c0_11 = arith.constant 0 : index
    %20 = vector.load %arg5[%c0_10, %c0_11] : memref<32x16xf32, #tpu.memory_space<vmem>>, vector<32x16xf32>
    %cst_12 = arith.constant dense<0.000000e+00> : vector<32x128xf32>
    %21 = tpu.matmul %20, %19, %cst_12 {dimension_numbers = #tpu.dot_dimension_numbers<[1], [0], [0], [1], [0, 0, 1, 1], [], []>} : vector<32x16xf32>, vector<16x128xf32>, vector<32x128xf32> -> vector<32x128xf32>
    %c0_13 = arith.constant 0 : index
    %c0_14 = arith.constant 0 : index
    %22 = vector.load %arg6[%c0_13, %c0_14] : memref<32x1xf32, #tpu.memory_space<vmem>>, vector<32x1xf32>
    %23 = vector.broadcast %22 : vector<32x1xf32> to vector<32x128xf32>
    %24 = arith.addf %21, %23 : vector<32x128xf32>
    %c0_15 = arith.constant 0 : index
    %c0_16 = arith.constant 0 : index
    %c0_17 = arith.constant 0 : index
    %25 = vector.load %arg7[%c0_15, %c0_16, %c0_17] : memref<1x32x128xf32, #tpu.memory_space<vmem>>, vector<1x32x128xf32>
    %26 = vector.shape_cast %25 : vector<1x32x128xf32> to vector<32x128xf32>
    %27 = vector.shape_cast %24 : vector<32x128xf32> to vector<1x32x128xf32>
    tpu.vector_store %arg7[%c0_15, %c0_16, %c0_17], %27 {strides = array<i32>} : memref<1x32x128xf32, #tpu.memory_space<vmem>>, vector<1x32x128xf32>,
    return
  }
  func.func @transform_0(%arg0: i32, %arg1: i32) -> (i32, i32, i32) {
    %c0_i32 = arith.constant 0 : i32
    %c0_i32_0 = arith.constant 0 : i32
    return %arg0, %c0_i32, %arg1 : i32, i32, i32
  }
  func.func @transform_1(%arg0: i32, %arg1: i32) -> (i32, i32) {
    %c0_i32 = arith.constant 0 : i32
    %c0_i32_0 = arith.constant 0 : i32
    %c0_i32_1 = arith.constant 0 : i32
    return %c0_i32, %c0_i32_0 : i32, i32
  }
  func.func @transform_2(%arg0: i32, %arg1: i32) -> (i32, i32) {
    %c0_i32 = arith.constant 0 : i32
    %c0_i32_0 = arith.constant 0 : i32
    %c0_i32_1 = arith.constant 0 : i32
    return %c0_i32, %c0_i32_0 : i32, i32
  }
  func.func @transform_3(%arg0: i32, %arg1: i32) -> (i32, i32) {
    %c0_i32 = arith.constant 0 : i32
    %c0_i32_0 = arith.constant 0 : i32
    %c0_i32_1 = arith.constant 0 : i32
    return %c0_i32, %c0_i32_0 : i32, i32
  }
  func.func @transform_4(%arg0: i32, %arg1: i32) -> (i32, i32) {
    %c0_i32 = arith.constant 0 : i32
    %c0_i32_0 = arith.constant 0 : i32
    %c0_i32_1 = arith.constant 0 : i32
    return %c0_i32, %c0_i32_0 : i32, i32
  }
  func.func @transform_5(%arg0: i32, %arg1: i32) -> (i32, i32, i32) {
    %c0_i32 = arith.constant 0 : i32
    %c0_i32_0 = arith.constant 0 : i32
    return %arg0, %c0_i32, %arg1 : i32, i32, i32
  }
}

</mosaic_0001>

<llo_original>
// kernel: tpu_custom_call.1
$region0: #{tpu_custom_call.1}
  #allocation0 [shape = 'u32[]', space=smem, size = 0x4, offset = 0x4, fixed_abs, tag = 'smem constant byte address 0x4 - core index']
  #allocation1 [shape = 'u32[72,128]{1,0:T(1,128)}', space=vmem, size = 0x9000, scoped, tag = 'internal scratch']
  %s0 = inlined_call_operand.vmem [shape: f32[2,4,256], index: 0, kind: input, shape index: {}]
  %s1 = inlined_call_operand.vmem [shape: f32[16,4], index: 1, kind: input, shape index: {}]
  %s2 = inlined_call_operand.vmem [shape: f32[16,1], index: 2, kind: input, shape index: {}]
  %s3 = inlined_call_operand.vmem [shape: f32[32,16], index: 3, kind: input, shape index: {}]
  %s4 = inlined_call_operand.vmem [shape: f32[32,1], index: 4, kind: input, shape index: {}]
  %s5 = inlined_call_operand.hbm [shape: f32[2,32,256], index: 5, kind: output, shape index: {}]
  %s6 = sld [smem:[#allocation0]]
  $region53: #{tpu_custom_call.1} parent=0
    _
  %s8 = ssub.s32 1, %s6
  %s9 = scalar_select 0, %s8, %s6
  $region1: #{tpu_custom_call.1} parent=0
    #allocation2 [shape = 'u8[32768]{0}', space=vmem, size = 0x8000, scoped, tag = 'output window, operand 0']
    #allocation3 [shape = 's32[2]{0}', space=sflag, size = 0x8, scoped, tag = 'scoped memory for tpu_custom_call.1']
    %10 = vsyncpa [#allocation3], 0
    %s11 = scalar_lea.sflag [#allocation3], 1
    %12 = vsyncpa %s11, 0
    loop: start=0, step=1, limit=6
    $region2: #{tpu_custom_call.1} parent=1 // loop_pre_header
      _
    $region3: #{tpu_custom_call.1} parent=1 // loop_header
      %s14 = sphi 0, %s18
      %p15 = scmp.ge.s32.totalorder %s14, 6
      %s21 = sphi 0, %s33
      %s22 = sphi 0, %s29
      %s23 = sphi 0, %s21
      %s24 = sphi 0, %s22
      %s25 = sphi 0, %s23
      %s26 = sphi 0, %s24
      %s38 = sphi 0, %s40
      %s41 = sphi 0, %s38
      %s42 = sphi 0, %s41
      %s58 = sphi 0, %s42
      %s62 = sphi 0, %s62
      %s64 = sphi 0, %s62
      %s65 = sphi 0, %s64
      %s79 = sphi 0, %s65
      %s83 = sphi 0, %s83
      %s85 = sphi 0, %s83
      %s86 = sphi 0, %s85
      %s100 = sphi 0, %s86
      %s104 = sphi 0, %s104
      %s106 = sphi 0, %s104
      %s107 = sphi 0, %s106
      %s121 = sphi 0, %s107
      %s125 = sphi 0, %s125
      %s127 = sphi 0, %s125
      %s128 = sphi 0, %s127
      %s142 = sphi 0, %s128
      %s150 = sphi 0, %s152
      %s153 = sphi 0, %s150
      %s154 = sphi 0, %s153
      %s170 = sphi 0, %s154
    $region4: #{tpu_custom_call.1} parent=1 // loop_header_branch
      %17 = sbr.rel (%p15) target = $region8
    $region5: #{tpu_custom_call.1} parent=1 // loop_body
      %s19 = ssub.s32 %s14, 1
      %s20 = ssub.s32 %s14, 2
      %s27 = sadd.s32 1, %s22
      %p28 = scmp.ge.s32.totalorder %s27, 2
      %s29 = scalar_select %p28, 0, %s27
      %s30 = sadd.s32 1, %s21
      %s31 = scalar_select %p28, %s30, %s21
      %p32 = scmp.ge.s32.totalorder %s31, 2
      %s33 = scalar_select %p32, 0, %s31
      %s34 = ssub.s32 %s21, %s33
      %s35 = ssub.s32 %s22, %s29
      %s36 = sor.u32 %s34, %s35
      %p37 = scmp.eq.s32.totalorder %s36, 0
      %s39 = sadd.s32 %s38, 1
      %s40 = scalar_select %p37, %s38, %s39
      %p43 = pneg %p37
      %p44 = scmp.eq.s32.totalorder %s14, 3
      %p45 = por %p43, %p44
      %p46 = scmp.ne.s32.totalorder %s38, %s41
      %p47 = scmp.eq.s32.totalorder %s14, 0
      %p48 = por %p46, %p47
      %p49 = scmp.ne.s32.totalorder %s38, %s41
      %p50 = scmp.eq.s32.totalorder %s19, 3
      %p51 = por %p49, %p50
      %p52 = scmp.ne.s32.totalorder %s41, %s42
      %p53 = scmp.eq.s32.totalorder %s19, 0
      %p54 = por %p52, %p53
      %p55 = scmp.ne.s32.totalorder %s41, %s42
      %p56 = scmp.eq.s32.totalorder %s20, 3
      %p57 = por %p55, %p56
      %p59 = scmp.ne.s32.totalorder %s42, %s58
      %p60 = scmp.eq.s32.totalorder %s20, 0
      %p61 = por %p59, %p60
      %s63 = sadd.s32 %s62, 1
      %p66 = scmp.eq.s32.totalorder %s14, 3
      %p67 = scmp.ne.s32.totalorder %s62, %s64
      %p68 = scmp.eq.s32.totalorder %s14, 0
      %p69 = por %p67, %p68
      %p70 = scmp.ne.s32.totalorder %s62, %s64
      %p71 = scmp.eq.s32.totalorder %s19, 3
      %p72 = por %p70, %p71
      %p73 = scmp.ne.s32.totalorder %s64, %s65
      %p74 = scmp.eq.s32.totalorder %s19, 0
      %p75 = por %p73, %p74
      %p76 = scmp.ne.s32.totalorder %s64, %s65
      %p77 = scmp.eq.s32.totalorder %s20, 3
      %p78 = por %p76, %p77
      %p80 = scmp.ne.s32.totalorder %s65, %s79
      %p81 = scmp.eq.s32.totalorder %s20, 0
      %p82 = por %p80, %p81
      %s84 = sadd.s32 %s83, 1
      %p87 = scmp.eq.s32.totalorder %s14, 3
      %p88 = scmp.ne.s32.totalorder %s83, %s85
      %p89 = scmp.eq.s32.totalorder %s14, 0
      %p90 = por %p88, %p89
      %p91 = scmp.ne.s32.totalorder %s83, %s85
      %p92 = scmp.eq.s32.totalorder %s19, 3
      %p93 = por %p91, %p92
      %p94 = scmp.ne.s32.totalorder %s85, %s86
      %p95 = scmp.eq.s32.totalorder %s19, 0
      %p96 = por %p94, %p95
      %p97 = scmp.ne.s32.totalorder %s85, %s86
      %p98 = scmp.eq.s32.totalorder %s20, 3
      %p99 = por %p97, %p98
      %p101 = scmp.ne.s32.totalorder %s86, %s100
      %p102 = scmp.eq.s32.totalorder %s20, 0
      %p103 = por %p101, %p102
      %s105 = sadd.s32 %s104, 1
      %p108 = scmp.eq.s32.totalorder %s14, 3
      %p109 = scmp.ne.s32.totalorder %s104, %s106
      %p110 = scmp.eq.s32.totalorder %s14, 0
      %p111 = por %p109, %p110
      %p112 = scmp.ne.s32.totalorder %s104, %s106
      %p113 = scmp.eq.s32.totalorder %s19, 3
      %p114 = por %p112, %p113
      %p115 = scmp.ne.s32.totalorder %s106, %s107
      %p116 = scmp.eq.s32.totalorder %s19, 0
      %p117 = por %p115, %p116
      %p118 = scmp.ne.s32.totalorder %s106, %s107
      %p119 = scmp.eq.s32.totalorder %s20, 3
      %p120 = por %p118, %p119
      %p122 = scmp.ne.s32.totalorder %s107, %s121
      %p123 = scmp.eq.s32.totalorder %s20, 0
      %p124 = por %p122, %p123
      %s126 = sadd.s32 %s125, 1
      %p129 = scmp.eq.s32.totalorder %s14, 3
      %p130 = scmp.ne.s32.totalorder %s125, %s127
      %p131 = scmp.eq.s32.totalorder %s14, 0
      %p132 = por %p130, %p131
      %p133 = scmp.ne.s32.totalorder %s125, %s127
      %p134 = scmp.eq.s32.totalorder %s19, 3
      %p135 = por %p133, %p134
      %p136 = scmp.ne.s32.totalorder %s127, %s128
      %p137 = scmp.eq.s32.totalorder %s19, 0
      %p138 = por %p136, %p137
      %p139 = scmp.ne.s32.totalorder %s127, %s128
      %p140 = scmp.eq.s32.totalorder %s20, 3
      %p141 = por %p139, %p140
      %p143 = scmp.ne.s32.totalorder %s128, %s142
      %p144 = scmp.eq.s32.totalorder %s20, 0
      %p145 = por %p143, %p144
      %s146 = ssub.s32 %s21, %s33
      %s147 = ssub.s32 %s22, %s29
      %s148 = sor.u32 %s146, %s147
      %p149 = scmp.eq.s32.totalorder %s148, 0
      %s151 = sadd.s32 %s150, 1
      %s152 = scalar_select %p149, %s150, %s151
      %p155 = pneg %p149
      %p156 = scmp.eq.s32.totalorder %s14, 3
      %p157 = por %p155, %p156
      %p158 = scmp.ne.s32.totalorder %s150, %s153
      %p159 = scmp.eq.s32.totalorder %s14, 0
      %p160 = por %p158, %p159
      %p161 = scmp.ne.s32.totalorder %s150, %s153
      %p162 = scmp.eq.s32.totalorder %s19, 3
      %p163 = por %p161, %p162
      %p164 = scmp.ne.s32.totalorder %s153, %s154
      %p165 = scmp.eq.s32.totalorder %s19, 0
      %p166 = por %p164, %p165
      %p167 = scmp.ne.s32.totalorder %s153, %s154
      %p168 = scmp.eq.s32.totalorder %s20, 3
      %p169 = por %p167, %p168
      %p171 = scmp.ne.s32.totalorder %s154, %s170
      %p172 = scmp.eq.s32.totalorder %s20, 0
      %p173 = por %p171, %p172
      %p174 = scmp.le.s32.totalorder 1, %s14
      %p175 = scmp.lt.s32.totalorder %s14, 5
      %p176 = pnand %p174, %p175
      %p177 = pneg %p176
      // Predicated region
      $region9: #{tpu_custom_call.1} parent=5 // pred_check
        _
      $region10: #{tpu_custom_call.1} parent=5 // pred_check_branch
        %179 = sbr.rel (%p176) target = $region12
      $region11: #{tpu_custom_call.1} parent=5 // pred_region
        %s180 = ssub.s32 %s14, 1
        // Predicated region
        $region13: #{tpu_custom_call.1} parent=11 // pred_check
          %p181 = pneg %p75
        $region14: #{tpu_custom_call.1} parent=11 // pred_check_branch
          %183 = sbr.rel (%p181) target = $region16
        $region15: #{tpu_custom_call.1} parent=11 // pred_region
          _
        $region16: #{tpu_custom_call.1} parent=11 // pred_fallthru
          _
        // Predicated region
        $region17: #{tpu_custom_call.1} parent=11 // pred_check
          %p184 = pneg %p96
        $region18: #{tpu_custom_call.1} parent=11 // pred_check_branch
          %186 = sbr.rel (%p184) target = $region20
        $region19: #{tpu_custom_call.1} parent=11 // pred_region
          _
        $region20: #{tpu_custom_call.1} parent=11 // pred_fallthru
          _
        // Predicated region
        $region21: #{tpu_custom_call.1} parent=11 // pred_check
          %p187 = pneg %p117
        $region22: #{tpu_custom_call.1} parent=11 // pred_check_branch
          %189 = sbr.rel (%p187) target = $region24
        $region23: #{tpu_custom_call.1} parent=11 // pred_region
          _
        $region24: #{tpu_custom_call.1} parent=11 // pred_fallthru
          _
        // Predicated region
        $region25: #{tpu_custom_call.1} parent=11 // pred_check
          %p190 = pneg %p138
        $region26: #{tpu_custom_call.1} parent=11 // pred_check_branch
          %192 = sbr.rel (%p190) target = $region28
        $region27: #{tpu_custom_call.1} parent=11 // pred_region
          _
        $region28: #{tpu_custom_call.1} parent=11 // pred_fallthru
          _
      $region12: #{tpu_custom_call.1} parent=5 // pred_fallthru
        _
      %p193 = scmp.lt.s32.totalorder %s14, 4
      // Predicated region
      $region29: #{tpu_custom_call.1} parent=5 // pred_check
        %p194 = pneg %p193
      $region30: #{tpu_custom_call.1} parent=5 // pred_check_branch
        %196 = sbr.rel (%p194) target = $region32
      $region31: #{tpu_custom_call.1} parent=5 // pred_region
        // Predicated region
        $region33: #{tpu_custom_call.1} parent=31 // pred_check
          %p197 = pneg %p48
        $region34: #{tpu_custom_call.1} parent=31 // pred_check_branch
          %199 = sbr.rel (%p197) target = $region36
        $region35: #{tpu_custom_call.1} parent=31 // pred_region
          %p200 = scmp.lt.s32.totalorder %s21, 1
          %s201 = scalar_select %p200, %s21, 1
          %p202 = scmp.lt.s32.totalorder %s22, 1
          %s203 = scalar_select %p202, %s22, 1
          %s204 = smul.addr %s201, 2
          %s205 = sadd.s32 %s203, %s204
          %s206 = smul.addr %s205, 4
          %s207 = scalar_lea.vmem %s0, %s206
        $region36: #{tpu_custom_call.1} parent=31 // pred_fallthru
          _
      $region32: #{tpu_custom_call.1} parent=5 // pred_fallthru
        _
      %p208 = scmp.le.s32.totalorder 1, %s14
      %p209 = scmp.lt.s32.totalorder %s14, 5
      %p210 = pnand %p208, %p209
      %p211 = pneg %p210
      // Predicated region
      $region37: #{tpu_custom_call.1} parent=5 // pred_check
        _
      $region38: #{tpu_custom_call.1} parent=5 // pred_check_branch
        %213 = sbr.rel (%p210) target = $region40
      $region39: #{tpu_custom_call.1} parent=5 // pred_region
        %s214 = ssub.s32 %s14, 1
        %p215 = scmp.lt.s32.totalorder %s23, 1
        %s216 = scalar_select %p215, %s23, 1
        %p217 = scmp.lt.s32.totalorder %s24, 1
        %s218 = scalar_select %p217, %s24, 1
        %s219 = smul.addr %s216, 2
        %s220 = sadd.s32 %s218, %s219
        %s221 = smul.addr %s220, 4
        %s222 = scalar_lea.vmem %s0, %s221
        %p223 = pneg %p54
        %p224 = pneg %p51
        %p225 = pneg %p75
        %p226 = pneg %p72
        %p227 = pneg %p96
        %p228 = pneg %p93
        %p229 = pneg %p117
        %p230 = pneg %p114
        %p231 = pneg %p138
        %p232 = pneg %p135
        %p233 = pneg %p166
        %p234 = pneg %p163
        %s235 = sand.u32 %s153, 1
        %s236 = scalar_lea.sflag [#allocation3], %s235
        %s237 = sand.u32 %s153, 1
        %s238 = smul.addr %s237, 32
        %s239 = scalar_lea.vmem [#allocation2], %s238
        %p240 = scmp.lt.s32.totalorder %s23, 1
        %s241 = scalar_select %p240, %s23, 1
        %p242 = scmp.lt.s32.totalorder %s24, 1
        %s243 = scalar_select %p242, %s24, 1
        %s244 = smul.addr %s241, 2
        %s245 = sadd.s32 %s243, %s244
        %s246 = smul.addr %s245, 4
        %s247 = scalar_lea.vmem %s0, %s246
        %v248 = vld [vmem:[%s247] sm:$0xf]
        %v249 = vld [vmem:[%s1] sm:$0xff]
        %v250 = vld [vmem:[%s1 + $0x8] sm:$0xff]
        %v251 = vld [vmem:[%s2] sm:$0xff]
        %v252 = vld [vmem:[%s2 + $0x8] sm:$0xff]
        %254 = vset.pattern.permute.xlu0 0
        %255 = vperm.xlu0 %254, %v251
        %v256 = vpop.permute.xlu0 %255
        %259 = vset.pattern.permute.xlu0 0
        %260 = vperm.xlu0 %259, %v252
        %v261 = vpop.permute.xlu0 %260
        %vm263 = vcmask 31744
        %v265 = vsel %vm263, %v249, 0
        %v268 = vsel %vm263, %v250, 0
        %vm270 = vcmask 1043456
        %v272 = vsel %vm270, %v248, 0
        %274 = vmatpush.msra.mxu0 0.0
        %275 = vmatpush.msra.mxu0 0.0
        %276 = vmatpush.msra.mxu0 0.0
        %277 = vmatpush.msra.mxu0 0.0
        %278 = vmatpush.msra.mxu0 0.0
        %279 = vmatpush.msra.mxu0 0.0
        %280 = vmatpush.msra.mxu0 0.0
        %281 = vmatpush.msra.mxu0 0.0
        %282 = vmatpush.msra.mxu0 0.0
        %283 = vmatpush.msra.mxu0 0.0
        %284 = vmatpush.msra.mxu0 0.0
        %285 = vmatpush.msra.mxu0 0.0
        %286 = vmatpush.msra.mxu0 0.0
        %287 = vmatpush.msra.mxu0 0.0
        %288 = vmatpush.msra.mxu0 0.0
        %289 = vmatpush.msra.mxu0 %v272
        %290 = vmatmul.f32.gmra.mxu0 %v265
        %v291 = vpop.f32.mrf.mxu0
        %v292 = vadd.f32 %v256, %v291
        %293 = vmatmul.f32.gmra.mxu0 %v268
        %v294 = vpop.f32.mrf.mxu0
        %v295 = vadd.f32 %v261, %v294
        %296 = vdwg.mxu0
        %v297 = vmul.f32 %v292, %v292
        %v298 = vmul.f32 %v295, %v295
        %v299 = vmul.f32 %v292, %v297
        %v300 = vmul.f32 %v295, %v298
        %v301 = vmul.f32 %v299, 0.044715
        %v302 = vmul.f32 %v300, 0.044715
        %v303 = vadd.f32 %v292, %v301
        %v304 = vadd.f32 %v295, %v302
        %v305 = vmul.f32 %v303, 0.7978846
        %v306 = vmul.f32 %v304, 0.7978846
        %v307 = vtanh.pop %v305
        %v308 = vtanh.pop %v306
        %v309 = vadd.f32 %v307, 1.0
        %v310 = vadd.f32 %v308, 1.0
        %v311 = vmul.f32 %v309, 0.5
        %v312 = vmul.f32 %v310, 0.5
        %v313 = vmul.f32 %v292, %v311
        %v314 = vmul.f32 %v295, %v312
        %v315 = vld [vmem:[%s3] sm:$0xff]
        %v316 = vld [vmem:[%s3 + $0x8] sm:$0xff]
        %v317 = vld [vmem:[%s3 + $0x10] sm:$0xff]
        %v318 = vld [vmem:[%s3 + $0x18] sm:$0xff]
        %v319 = vld [vmem:[%s4] sm:$0xff]
        %v320 = vld [vmem:[%s4 + $0x8] sm:$0xff]
        %v321 = vld [vmem:[%s4 + $0x10] sm:$0xff]
        %v322 = vld [vmem:[%s4 + $0x18] sm:$0xff]
        %324 = vset.pattern.permute.xlu0 0
        %325 = vperm.xlu0 %324, %v319
        %v326 = vpop.permute.xlu0 %325
        %329 = vset.pattern.permute.xlu0 0
        %330 = vperm.xlu0 %329, %v320
        %v331 = vpop.permute.xlu0 %330
        %334 = vset.pattern.permute.xlu0 0
        %335 = vperm.xlu0 %334, %v321
        %v336 = vpop.permute.xlu0 %335
        %339 = vset.pattern.permute.xlu0 0
        %340 = vperm.xlu0 %339, %v322
        %v341 = vpop.permute.xlu0 %340
        %vm343 = vcmask 130048
        %v345 = vsel %vm343, %v315, 0
        %v348 = vsel %vm343, %v316, 0
        %v351 = vsel %vm343, %v317, 0
        %v354 = vsel %vm343, %v318, 0
        %356 = vmatpush.msra.mxu0 0.0
        %357 = vmatpush.msra.mxu0 0.0
        %358 = vmatpush.msra.mxu0 0.0
        %359 = vmatpush.msra.mxu0 0.0
        %360 = vmatpush.msra.mxu0 0.0
        %361 = vmatpush.msra.mxu0 0.0
        %362 = vmatpush.msra.mxu0 0.0
        %363 = vmatpush.msra.mxu0 0.0
        %364 = vmatpush.msra.mxu0 0.0
        %365 = vmatpush.msra.mxu0 0.0
        %366 = vmatpush.msra.mxu0 0.0
        %367 = vmatpush.msra.mxu0 0.0
        %368 = vmatpush.msra.mxu0 0.0
        %369 = vmatpush.msra.mxu0 0.0
        %370 = vmatpush.msra.mxu0 %v314
        %371 = vmatpush.msra.mxu0 %v313
        %372 = vmatmul.f32.gmra.mxu0 %v345
        %v373 = vpop.f32.mrf.mxu0
        %v374 = vadd.f32 %v326, %v373
        %375 = vmatmul.f32.gmra.mxu0 %v348
        %v376 = vpop.f32.mrf.mxu0
        %v377 = vadd.f32 %v331, %v376
        %378 = vmatmul.f32.gmra.mxu0 %v351
        %v379 = vpop.f32.mrf.mxu0
        %v380 = vadd.f32 %v336, %v379
        %381 = vmatmul.f32.gmra.mxu0 %v354
        %v382 = vpop.f32.mrf.mxu0
        %v383 = vadd.f32 %v341, %v382
        %384 = vdwg.mxu0
        %385 = vst [vmem:[%s239] sm:$0xff] %v374
        %386 = vst [vmem:[%s239 + $0x8] sm:$0xff] %v377
        %387 = vst [vmem:[%s239 + $0x10] sm:$0xff] %v380
        %388 = vst [vmem:[%s239 + $0x18] sm:$0xff] %v383
        %s389 = sand.u32 %s153, 1
        %s390 = scalar_lea.sflag [#allocation3], %s389
        %s391 = sand.u32 %s153, 1
        %s392 = smul.addr %s391, 32
        %s393 = scalar_lea.vmem [#allocation2], %s392
        // Predicated region
        $region41: #{tpu_custom_call.1} parent=39 // pred_check
          %p394 = pneg %p163
        $region42: #{tpu_custom_call.1} parent=39 // pred_check_branch
          %396 = sbr.rel (%p394) target = $region44
        $region43: #{tpu_custom_call.1} parent=39 // pred_region
          %398 = vsyncadd %s390, 0
          %s399 = smul.addr %s23, 8
          %s400 = sadd.s32 %s24, %s399
          %s401 = smul.addr %s400, 8
          %s402 = scalar_lea.hbm %s5, %s401
          %s403 = sshll.u32 %s393, 4
          %s404 = int_to_ptr.vmem [resolvable:$true] %s403
          %s405 = sshll.u32 %s402, 4
          %s406 = int_to_ptr.hbm [resolvable:$true] %s405
          %411 = dma.vmem_to_hbm [thread:$0]  %s404, 512, %s406, %s390, 128, 256, 8
        $region44: #{tpu_custom_call.1} parent=39 // pred_fallthru
          _
      $region40: #{tpu_custom_call.1} parent=5 // pred_fallthru
        _
      %p412 = scmp.le.s32.totalorder 2, %s14
      // Predicated region
      $region45: #{tpu_custom_call.1} parent=5 // pred_check
        %p413 = pneg %p412
      $region46: #{tpu_custom_call.1} parent=5 // pred_check_branch
        %415 = sbr.rel (%p413) target = $region48
      $region47: #{tpu_custom_call.1} parent=5 // pred_region
        %s416 = ssub.s32 %s14, 2
        // Predicated region
        $region49: #{tpu_custom_call.1} parent=47 // pred_check
          %p417 = pneg %p169
        $region50: #{tpu_custom_call.1} parent=47 // pred_check_branch
          %419 = sbr.rel (%p417) target = $region52
        $region51: #{tpu_custom_call.1} parent=47 // pred_region
          %s420 = sand.u32 %s154, 1
          %s421 = scalar_lea.sflag [#allocation3], %s420
          %s422 = sand.u32 %s154, 1
          %s423 = smul.addr %s422, 32
          %s424 = scalar_lea.vmem [#allocation2], %s423
          %426 = dma.done %s421, 512
        $region52: #{tpu_custom_call.1} parent=47 // pred_fallthru
          _
      $region48: #{tpu_custom_call.1} parent=5 // pred_fallthru
        _
    $region6: #{tpu_custom_call.1} parent=1 // loop_footer
      %s18 = sadd.s32 1, %s14
    $region7: #{tpu_custom_call.1} parent=1 // loop_footer_branch
      %13 = sbr.rel target = $region3
    $region8: #{tpu_custom_call.1} parent=1 // loop_exit
      _
    %427 = vsyncpa [#allocation3], 1
    %s428 = scalar_lea.sflag [#allocation3], 1
    %429 = vsyncpa %s428, 1

</llo_original>
